<compile_context>
chip_gen: v5e
topology: v5e:2x2
jax: 0.10.0
libtpu: 0.0.40
codegen_flags: <defaults>
</compile_context>

<pallas_src>
import functools

import jax
import jax.numpy as jnp
from jax.experimental import pallas as pl
from jax.experimental.pallas import tpu as pltpu


def _round_up(x, m):
    return (x + m - 1) // m * m


def _mlp_logsoftmax_kernel(x_ref, w1_ref, b1_ref, w2_ref, b2_ref, out_ref):
    # Linear 1: bf16 x @ bf16 w1 on the MXU with f32 accumulation, then bias + ReLU (f32 VPU).
    h = jnp.dot(x_ref[...], w1_ref[...], preferred_element_type=jnp.float32)  # (TN, 32)
    h = jnp.maximum(h + b1_ref[...], 0.0)

    # Linear 2 (tiny 32x10), f32 throughout.
    logits = jnp.dot(h, w2_ref[...], preferred_element_type=jnp.float32) + b2_ref[...]  # (TN, 10)

    # Numerically-stable log_softmax along the last dim (PyTorch F.log_softmax on 2-D -> dim=1).
    m = jnp.max(logits, axis=-1, keepdims=True)
    shifted = logits - m
    lse = jnp.log(jnp.sum(jnp.exp(shifted), axis=-1, keepdims=True))
    out_ref[...] = (shifted - lse).astype(out_ref.dtype)


@functools.partial(jax.jit, static_argnames=("block_n",))
def model2_forward(inputs, w1, b1, w2, b2, *, block_n=512):
    # Flatten like inputs.view(-1, 28*28)
    x = inputs.reshape(-1, 28 * 28)
    n = x.shape[0]

    # bf16 on the big streamed operand (and the matching weight); exact for the MXU path,
    # accumulation stays f32 inside the kernel.
    x = x.astype(jnp.bfloat16)
    w1_bf16 = w1.astype(jnp.bfloat16)

    # Batch tile: multiple of 16 (bf16 sublane packing), capped at block_n.
    tn = block_n if n >= block_n else _round_up(max(n, 1), 16)
    n_pad = _round_up(n, tn)
    if n_pad != n:
        x = jnp.pad(x, ((0, n_pad - n), (0, 0)))

    out = pl.pallas_call(
        _mlp_logsoftmax_kernel,
        out_shape=jax.ShapeDtypeStruct((n_pad, 10), jnp.float32),
        grid_spec=pltpu.PrefetchScalarGridSpec(
            num_scalar_prefetch=0,
            grid=(n_pad // tn,),
            in_specs=[
                pl.BlockSpec((tn, 784), lambda i: (i, 0)),   # x tile: streams / double-buffers
                pl.BlockSpec((784, 32), lambda i: (0, 0)),   # w1: resident
                pl.BlockSpec((1, 32), lambda i: (0, 0)),     # b1: resident
                pl.BlockSpec((32, 10), lambda i: (0, 0)),    # w2: resident
                pl.BlockSpec((1, 10), lambda i: (0, 0)),     # b2: resident
            ],
            out_specs=pl.BlockSpec((tn, 10), lambda i: (i, 0)),
        ),
        compiler_params=pltpu.CompilerParams(
            # Batch tiles are independent -> shardable across TensorCores on v7x.
            dimension_semantics=("parallel",),
        ),
    )(x, w1_bf16, b1, w2, b2)

    return out[:n]


def init_params(key):
    # Deterministic init mimicking PyTorch nn.Linear default (uniform +- 1/sqrt(fan_in)).
    # Weights are stored transposed vs PyTorch: (in_features, out_features), kernel does x @ W + b.
    k1, k2, k3, k4 = jax.random.split(key, 4)
    lim1 = 1.0 / jnp.sqrt(784.0)
    lim2 = 1.0 / jnp.sqrt(32.0)
    w1 = jax.random.uniform(k1, (784, 32), jnp.float32, -lim1, lim1)
    b1 = jax.random.uniform(k2, (1, 32), jnp.float32, -lim1, lim1)
    w2 = jax.random.uniform(k3, (32, 10), jnp.float32, -lim2, lim2)
    b2 = jax.random.uniform(k4, (1, 10), jnp.float32, -lim2, lim2)
    return w1, b1, w2, b2


def _reference(inputs, w1, b1, w2, b2):
    # Pure-JAX reference matching the kernel's bf16 feed of the first matmul.
    x = inputs.reshape(-1, 784).astype(jnp.bfloat16).astype(jnp.float32)
    w1f = w1.astype(jnp.bfloat16).astype(jnp.float32)
    h = jnp.maximum(x @ w1f + b1, 0.0)
    logits = h @ w2 + b2
    return jax.nn.log_softmax(logits, axis=-1)


if __name__ == "__main__":
    key = jax.random.PRNGKey(0)
    kx, kx2, kp = jax.random.split(key, 3)
    w1, b1, w2, b2 = init_params(kp)

    # Small MNIST-like demo batch: (N, 1, 28, 28) NCHW; forward flattens to (N, 784).
    N = 8
    inputs = jax.random.normal(kx, (N, 1, 28, 28), jnp.float32)
    out = jax.block_until_ready(model2_forward(inputs, w1, b1, w2, b2))
    ref = _reference(inputs, w1, b1, w2, b2)
    assert out.shape == (N, 10)
    assert jnp.allclose(out, ref, atol=5e-3, rtol=5e-3), float(jnp.max(jnp.abs(out - ref)))

    # Exercise the tiled + padded path (multiple grid steps, N not a multiple of the tile).
    N2 = 1040
    inputs2 = jax.random.normal(kx2, (N2, 1, 28, 28), jnp.float32)
    out2 = jax.block_until_ready(model2_forward(inputs2, w1, b1, w2, b2))
    ref2 = _reference(inputs2, w1, b1, w2, b2)
    assert out2.shape == (N2, 10)
    assert jnp.allclose(out2, ref2, atol=5e-3, rtol=5e-3), float(jnp.max(jnp.abs(out2 - ref2)))

    print("KERNEL_OK")
</pallas_src>

<mosaic_0001>
module attributes {stable_mosaic.version = 11 : i64} {
  func.func @_mlp_logsoftmax_kernel(%arg0: i32, %arg1: memref<16x784xbf16, #tpu.memory_space<vmem>>, %arg2: memref<784x32xbf16, #tpu.memory_space<vmem>>, %arg3: memref<1x32xf32, #tpu.memory_space<vmem>>, %arg4: memref<32x10xf32, #tpu.memory_space<vmem>>, %arg5: memref<1x10xf32, #tpu.memory_space<vmem>>, %arg6: memref<16x10xf32, #tpu.memory_space<vmem>>) attributes {dimension_semantics = [#tpu.dimension_semantics<parallel>], iteration_bounds = array<i64: 1>, scalar_prefetch = 0 : i64, scratch_operands = 0 : i64, tpu.core_type = #tpu.core_type<tc>, window_params = [{transform_indices = @transform_0, window_bounds = array<i64: 16, 784>}, {pipeline_mode = #tpu.pipeline_mode<synchronous>, transform_indices = @transform_1, window_bounds = array<i64: 784, 32>}, {pipeline_mode = #tpu.pipeline_mode<synchronous>, transform_indices = @transform_2, window_bounds = array<i64: 1, 32>}, {pipeline_mode = #tpu.pipeline_mode<synchronous>, transform_indices = @transform_3, window_bounds = array<i64: 32, 10>}, {pipeline_mode = #tpu.pipeline_mode<synchronous>, transform_indices = @transform_4, window_bounds = array<i64: 1, 10>}, {transform_indices = @transform_5, window_bounds = array<i64: 16, 10>}]} {
    %c0 = arith.constant 0 : index
    %c0_0 = arith.constant 0 : index
    %0 = vector.load %arg1[%c0, %c0_0] : memref<16x784xbf16, #tpu.memory_space<vmem>>, vector<16x784xbf16>
    %c0_1 = arith.constant 0 : index
    %c0_2 = arith.constant 0 : index
    %1 = vector.load %arg2[%c0_1, %c0_2] : memref<784x32xbf16, #tpu.memory_space<vmem>>, vector<784x32xbf16>
    %cst = arith.constant dense<0.000000e+00> : vector<16x32xf32>
    %2 = tpu.matmul %0, %1, %cst {dimension_numbers = #tpu.dot_dimension_numbers<[1], [0], [0], [1], [0, 0, 1, 1], [], []>} : vector<16x784xbf16>, vector<784x32xbf16>, vector<16x32xf32> -> vector<16x32xf32>
    %c0_3 = arith.constant 0 : index
    %c0_4 = arith.constant 0 : index
    %3 = vector.load %arg3[%c0_3, %c0_4] : memref<1x32xf32, #tpu.memory_space<vmem>>, vector<1x32xf32>
    %4 = vector.broadcast %3 : vector<1x32xf32> to vector<16x32xf32>
    %5 = arith.addf %2, %4 : vector<16x32xf32>
    %cst_5 = arith.constant 0.000000e+00 : f32
    %6 = vector.broadcast %cst_5 : f32 to vector<16x32xf32>
    %7 = arith.maximumf %5, %6 : vector<16x32xf32>
    %c0_6 = arith.constant 0 : index
    %c0_7 = arith.constant 0 : index
    %8 = vector.load %arg4[%c0_6, %c0_7] : memref<32x10xf32, #tpu.memory_space<vmem>>, vector<32x10xf32>
    %cst_8 = arith.constant dense<0.000000e+00> : vector<16x10xf32>
    %9 = tpu.matmul %7, %8, %cst_8 {dimension_numbers = #tpu.dot_dimension_numbers<[1], [0], [0], [1], [0, 0, 1, 1], [], []>} : vector<16x32xf32>, vector<32x10xf32>, vector<16x10xf32> -> vector<16x10xf32>
    %c0_9 = arith.constant 0 : index
    %c0_10 = arith.constant 0 : index
    %10 = vector.load %arg5[%c0_9, %c0_10] : memref<1x10xf32, #tpu.memory_space<vmem>>, vector<1x10xf32>
    %11 = vector.broadcast %10 : vector<1x10xf32> to vector<16x10xf32>
    %12 = arith.addf %9, %11 : vector<16x10xf32>
    %cst_11 = arith.constant dense<0xFF800000> : vector<16xf32>
    %13 = vector.multi_reduction <maximumf>, %12, %cst_11 [1] : vector<16x10xf32> to vector<16xf32>
    %14 = vector.shape_cast %13 : vector<16xf32> to vector<16x1xf32>
    %15 = vector.broadcast %14 : vector<16x1xf32> to vector<16x10xf32>
    %16 = arith.subf %12, %15 : vector<16x10xf32>
    %17 = math.exp %16 : vector<16x10xf32>
    %cst_12 = arith.constant dense<0.000000e+00> : vector<16xf32>
    %18 = vector.multi_reduction <add>, %17, %cst_12 [1] : vector<16x10xf32> to vector<16xf32>
    %19 = vector.shape_cast %18 : vector<16xf32> to vector<16x1xf32>
    %20 = math.log %19 : vector<16x1xf32>
    %21 = vector.broadcast %20 : vector<16x1xf32> to vector<16x10xf32>
    %22 = arith.subf %16, %21 : vector<16x10xf32>
    %c0_13 = arith.constant 0 : index
    %c0_14 = arith.constant 0 : index
    %23 = vector.load %arg6[%c0_13, %c0_14] : memref<16x10xf32, #tpu.memory_space<vmem>>, vector<16x10xf32>
    tpu.vector_store %arg6[%c0_13, %c0_14], %22 {strides = array<i32>} : memref<16x10xf32, #tpu.memory_space<vmem>>, vector<16x10xf32>,
    return
  }
  func.func @transform_0(%arg0: i32) -> (i32, i32) {
    %c0_i32 = arith.constant 0 : i32
    %c0_i32_0 = arith.constant 0 : i32
    return %arg0, %c0_i32 : i32, i32
  }
  func.func @transform_1(%arg0: i32) -> (i32, i32) {
    %c0_i32 = arith.constant 0 : i32
    %c0_i32_0 = arith.constant 0 : i32
    %c0_i32_1 = arith.constant 0 : i32
    return %c0_i32, %c0_i32_0 : i32, i32
  }
  func.func @transform_2(%arg0: i32) -> (i32, i32) {
    %c0_i32 = arith.constant 0 : i32
    %c0_i32_0 = arith.constant 0 : i32
    %c0_i32_1 = arith.constant 0 : i32
    return %c0_i32, %c0_i32_0 : i32, i32
  }
  func.func @transform_3(%arg0: i32) -> (i32, i32) {
    %c0_i32 = arith.constant 0 : i32
    %c0_i32_0 = arith.constant 0 : i32
    %c0_i32_1 = arith.constant 0 : i32
    return %c0_i32, %c0_i32_0 : i32, i32
  }
  func.func @transform_4(%arg0: i32) -> (i32, i32) {
    %c0_i32 = arith.constant 0 : i32
    %c0_i32_0 = arith.constant 0 : i32
    %c0_i32_1 = arith.constant 0 : i32
    return %c0_i32, %c0_i32_0 : i32, i32
  }
  func.func @transform_5(%arg0: i32) -> (i32, i32) {
    %c0_i32 = arith.constant 0 : i32
    %c0_i32_0 = arith.constant 0 : i32
    return %arg0, %c0_i32 : i32, i32
  }
}

</mosaic_0001>

<llo_original>
// kernel: model2_forward.1
$region0: #{model2_forward.1}
  #allocation0 [shape = 'u32[]', space=smem, size = 0x4, offset = 0x4, fixed_abs, tag = 'smem constant byte address 0x4 - core index']
  #allocation1 [shape = 'u32[72,128]{1,0:T(1,128)}', space=vmem, size = 0x9000, scoped, tag = 'internal scratch']
  %s0 = inlined_call_operand.vmem [shape: bf16[16,784], index: 0, kind: input, shape index: {}]
  %s1 = inlined_call_operand.vmem [shape: bf16[784,32], index: 1, kind: input, shape index: {}]
  %s2 = inlined_call_operand.vmem [shape: f32[1,32], index: 2, kind: input, shape index: {}]
  %s3 = inlined_call_operand.vmem [shape: f32[32,10], index: 3, kind: input, shape index: {}]
  %s4 = inlined_call_operand.vmem [shape: f32[1,10], index: 4, kind: input, shape index: {}]
  %s5 = inlined_call_operand.vmem [shape: f32[16,10], index: 5, kind: output, shape index: {}]
  %s6 = sld [smem:[#allocation0]]
  $region30: #{model2_forward.1} parent=0
    _
  %s8 = ssub.s32 1, %s6
  %s9 = scalar_select 0, %s8, %s6
  // Predicated region
  $region2: #{model2_forward.1} parent=0 // pred_check
    _
  $region3: #{model2_forward.1} parent=0 // pred_check_branch
    %11 = sbr.rel (0) target = $region5
  $region4: #{model2_forward.1} parent=0 // pred_region
    _
  $region5: #{model2_forward.1} parent=0 // pred_fallthru
    _
  // Predicated region
  $region6: #{model2_forward.1} parent=0 // pred_check
    _
  $region7: #{model2_forward.1} parent=0 // pred_check_branch
    %13 = sbr.rel (0) target = $region9
  $region8: #{model2_forward.1} parent=0 // pred_region
    _
  $region9: #{model2_forward.1} parent=0 // pred_fallthru
    _
  // Predicated region
  $region10: #{model2_forward.1} parent=0 // pred_check
    _
  $region11: #{model2_forward.1} parent=0 // pred_check_branch
    %15 = sbr.rel (0) target = $region13
  $region12: #{model2_forward.1} parent=0 // pred_region
    _
  $region13: #{model2_forward.1} parent=0 // pred_fallthru
    _
  // Predicated region
  $region14: #{model2_forward.1} parent=0 // pred_check
    _
  $region15: #{model2_forward.1} parent=0 // pred_check_branch
    %17 = sbr.rel (0) target = $region17
  $region16: #{model2_forward.1} parent=0 // pred_region
    _
  $region17: #{model2_forward.1} parent=0 // pred_fallthru
    _
  // Predicated region
  $region18: #{model2_forward.1} parent=0 // pred_check
    _
  $region19: #{model2_forward.1} parent=0 // pred_check_branch
    %19 = sbr.rel (0) target = $region21
  $region20: #{model2_forward.1} parent=0 // pred_region
    _
  $region21: #{model2_forward.1} parent=0 // pred_fallthru
    _
  %v21 = vld [vmem:[%s0] sm:$0xff]
  %v22 = vld [vmem:[%s0 + $0x8] sm:$0xff]
  %v23 = vld [vmem:[%s0 + $0x10] sm:$0xff]
  %v24 = vld [vmem:[%s0 + $0x18] sm:$0xf]
  %v25 = vld [vmem:[%s0 + $0x1c] sm:$0xff]
  %v26 = vld [vmem:[%s0 + $0x24] sm:$0xff]
  %v27 = vld [vmem:[%s0 + $0x2c] sm:$0xff]
  %v28 = vld [vmem:[%s0 + $0x34] sm:$0xf]
  %v29 = vld [vmem:[%s1] sm:$0xf]
  %v30 = vld [vmem:[%s1 + $0x4] sm:$0xf]
  %v31 = vld [vmem:[%s1 + $0x8] sm:$0xf]
  %v32 = vld [vmem:[%s1 + $0xc] sm:$0xf]
  %v33 = vld [vmem:[%s1 + $0x10] sm:$0xf]
  %v34 = vld [vmem:[%s1 + $0x14] sm:$0xf]
  %v35 = vld [vmem:[%s1 + $0x18] sm:$0xf]
  %v36 = vld [vmem:[%s1 + $0x1c] sm:$0xf]
  %v37 = vld [vmem:[%s1 + $0x20] sm:$0xf]
  %v38 = vld [vmem:[%s1 + $0x24] sm:$0xf]
  %v39 = vld [vmem:[%s1 + $0x28] sm:$0xf]
  %v40 = vld [vmem:[%s1 + $0x2c] sm:$0xf]
  %v41 = vld [vmem:[%s1 + $0x30] sm:$0xf]
  %v42 = vld [vmem:[%s1 + $0x34] sm:$0xf]
  %v43 = vld [vmem:[%s1 + $0x38] sm:$0xf]
  %v44 = vld [vmem:[%s1 + $0x3c] sm:$0xf]
  %v45 = vld [vmem:[%s1 + $0x40] sm:$0xf]
  %v46 = vld [vmem:[%s1 + $0x44] sm:$0xf]
  %v47 = vld [vmem:[%s1 + $0x48] sm:$0xf]
  %v48 = vld [vmem:[%s1 + $0x4c] sm:$0xf]
  %v49 = vld [vmem:[%s1 + $0x50] sm:$0xf]
  %v50 = vld [vmem:[%s1 + $0x54] sm:$0xf]
  %v51 = vld [vmem:[%s1 + $0x58] sm:$0xf]
  %v52 = vld [vmem:[%s1 + $0x5c] sm:$0xf]
  %v53 = vld [vmem:[%s1 + $0x60] sm:$0xf]
  %v54 = vld [vmem:[%s1 + $0x64] sm:$0xf]
  %v55 = vld [vmem:[%s1 + $0x68] sm:$0xf]
  %v56 = vld [vmem:[%s1 + $0x6c] sm:$0xf]
  %v57 = vld [vmem:[%s1 + $0x70] sm:$0xf]
  %v58 = vld [vmem:[%s1 + $0x74] sm:$0xf]
  %v59 = vld [vmem:[%s1 + $0x78] sm:$0xf]
  %v60 = vld [vmem:[%s1 + $0x7c] sm:$0xf]
  %v61 = vld [vmem:[%s1 + $0x80] sm:$0xf]
  %v62 = vld [vmem:[%s1 + $0x84] sm:$0xf]
  %v63 = vld [vmem:[%s1 + $0x88] sm:$0xf]
  %v64 = vld [vmem:[%s1 + $0x8c] sm:$0xf]
  %v65 = vld [vmem:[%s1 + $0x90] sm:$0xf]
  %v66 = vld [vmem:[%s1 + $0x94] sm:$0xf]
  %v67 = vld [vmem:[%s1 + $0x98] sm:$0xf]
  %v68 = vld [vmem:[%s1 + $0x9c] sm:$0xf]
  %v69 = vld [vmem:[%s1 + $0xa0] sm:$0xf]
  %v70 = vld [vmem:[%s1 + $0xa4] sm:$0xf]
  %v71 = vld [vmem:[%s1 + $0xa8] sm:$0xf]
  %v72 = vld [vmem:[%s1 + $0xac] sm:$0xf]
  %v73 = vld [vmem:[%s1 + $0xb0] sm:$0xf]
  %v74 = vld [vmem:[%s1 + $0xb4] sm:$0xf]
  %v75 = vld [vmem:[%s1 + $0xb8] sm:$0xf]
  %v76 = vld [vmem:[%s1 + $0xbc] sm:$0xf]
  %v77 = vld [vmem:[%s1 + $0xc0] sm:$0xf]
  %v78 = vld [vmem:[%s1 + $0xc4] sm:$0xf]
  %v79 = vld [vmem:[%s1 + $0xc8] sm:$0xf]
  %v80 = vld [vmem:[%s1 + $0xcc] sm:$0xf]
  %v81 = vld [vmem:[%s1 + $0xd0] sm:$0xf]
  %v82 = vld [vmem:[%s1 + $0xd4] sm:$0xf]
  %v83 = vld [vmem:[%s1 + $0xd8] sm:$0xf]
  %v84 = vld [vmem:[%s1 + $0xdc] sm:$0xf]
  %v85 = vld [vmem:[%s1 + $0xe0] sm:$0xf]
  %v86 = vld [vmem:[%s1 + $0xe4] sm:$0xf]
  %v87 = vld [vmem:[%s1 + $0xe8] sm:$0xf]
  %v88 = vld [vmem:[%s1 + $0xec] sm:$0xf]
  %v89 = vld [vmem:[%s1 + $0xf0] sm:$0xf]
  %v90 = vld [vmem:[%s1 + $0xf4] sm:$0xf]
  %v91 = vld [vmem:[%s1 + $0xf8] sm:$0xf]
  %v92 = vld [vmem:[%s1 + $0xfc] sm:$0xf]
  %v93 = vld [vmem:[%s1 + $0x100] sm:$0xf]
  %v94 = vld [vmem:[%s1 + $0x104] sm:$0xf]
  %v95 = vld [vmem:[%s1 + $0x108] sm:$0xf]
  %v96 = vld [vmem:[%s1 + $0x10c] sm:$0xf]
  %v97 = vld [vmem:[%s1 + $0x110] sm:$0xf]
  %v98 = vld [vmem:[%s1 + $0x114] sm:$0xf]
  %v99 = vld [vmem:[%s1 + $0x118] sm:$0xf]
  %v100 = vld [vmem:[%s1 + $0x11c] sm:$0xf]
  %v101 = vld [vmem:[%s1 + $0x120] sm:$0xf]
  %v102 = vld [vmem:[%s1 + $0x124] sm:$0xf]
  %v103 = vld [vmem:[%s1 + $0x128] sm:$0xf]
  %v104 = vld [vmem:[%s1 + $0x12c] sm:$0xf]
  %v105 = vld [vmem:[%s1 + $0x130] sm:$0xf]
  %v106 = vld [vmem:[%s1 + $0x134] sm:$0xf]
  %v107 = vld [vmem:[%s1 + $0x138] sm:$0xf]
  %v108 = vld [vmem:[%s1 + $0x13c] sm:$0xf]
  %v109 = vld [vmem:[%s1 + $0x140] sm:$0xf]
  %v110 = vld [vmem:[%s1 + $0x144] sm:$0xf]
  %v111 = vld [vmem:[%s1 + $0x148] sm:$0xf]
  %v112 = vld [vmem:[%s1 + $0x14c] sm:$0xf]
  %v113 = vld [vmem:[%s1 + $0x150] sm:$0xf]
  %v114 = vld [vmem:[%s1 + $0x154] sm:$0xf]
  %v115 = vld [vmem:[%s1 + $0x158] sm:$0xf]
  %v116 = vld [vmem:[%s1 + $0x15c] sm:$0xf]
  %v117 = vld [vmem:[%s1 + $0x160] sm:$0xf]
  %v118 = vld [vmem:[%s1 + $0x164] sm:$0xf]
  %v119 = vld [vmem:[%s1 + $0x168] sm:$0xf]
  %v120 = vld [vmem:[%s1 + $0x16c] sm:$0xf]
  %v121 = vld [vmem:[%s1 + $0x170] sm:$0xf]
  %v122 = vld [vmem:[%s1 + $0x174] sm:$0xf]
  %v123 = vld [vmem:[%s1 + $0x178] sm:$0xf]
  %v124 = vld [vmem:[%s1 + $0x17c] sm:$0xf]
  %v125 = vld [vmem:[%s1 + $0x180] sm:$0xf]
  %v126 = vld [vmem:[%s1 + $0x184] sm:$0xf]
  %v127 = vld [vmem:[%s2] sm:$0x1]
  %v129 = vperm.slane %v127, 0
  %v139 = vunpack.c.l.b16 %v21
  %v140 = vunpack.c.h.b16 %v21
  %v141 = vunpack.c.l.b16 %v22
  %v142 = vunpack.c.h.b16 %v22
  %v143 = vunpack.c.l.b16 %v23
  %v144 = vunpack.c.h.b16 %v23
  %v145 = vunpack.c.l.b16 %v24
  %v146 = vunpack.c.l.b16 %v25
  %v147 = vunpack.c.h.b16 %v25
  %v148 = vunpack.c.l.b16 %v26
  %v149 = vunpack.c.h.b16 %v26
  %v150 = vunpack.c.l.b16 %v27
  %v151 = vunpack.c.h.b16 %v27
  %v152 = vunpack.c.l.b16 %v28
  %v153 = vpack.c.b16 %v146, %v139
  %v154 = vpack.c.b16 %v147, %v140
  %v155 = vpack.c.b16 %v148, %v141
  %v156 = vpack.c.b16 %v149, %v142
  %v157 = vpack.c.b16 %v150, %v143
  %v158 = vpack.c.b16 %v151, %v144
  %v159 = vpack.c.b16 %v152, %v145
  %v264 = vunpack.c.l.b16 %v29
  %v265 = vunpack.c.l.b16 %v30
  %v266 = vunpack.c.l.b16 %v31
  %v267 = vunpack.c.l.b16 %v32
  %v268 = vunpack.c.l.b16 %v33
  %v269 = vunpack.c.l.b16 %v34
  %v270 = vunpack.c.l.b16 %v35
  %v271 = vunpack.c.l.b16 %v36
  %v272 = vunpack.c.l.b16 %v37
  %v273 = vunpack.c.l.b16 %v38
  %v274 = vunpack.c.l.b16 %v39
  %v275 = vunpack.c.l.b16 %v40
  %v276 = vunpack.c.l.b16 %v41
  %v277 = vunpack.c.l.b16 %v42
  %v278 = vunpack.c.l.b16 %v43
  %v279 = vunpack.c.l.b16 %v44
  %v280 = vunpack.c.l.b16 %v45
  %v281 = vunpack.c.l.b16 %v46
  %v282 = vunpack.c.l.b16 %v47
  %v283 = vunpack.c.l.b16 %v48
  %v284 = vunpack.c.l.b16 %v49
  %v285 = vunpack.c.l.b16 %v50
  %v286 = vunpack.c.l.b16 %v51
  %v287 = vunpack.c.l.b16 %v52
  %v288 = vunpack.c.l.b16 %v53
  %v289 = vunpack.c.l.b16 %v54
  %v290 = vunpack.c.l.b16 %v55
  %v291 = vunpack.c.l.b16 %v56
  %v292 = vunpack.c.l.b16 %v57
  %v293 = vunpack.c.l.b16 %v58
  %v294 = vunpack.c.l.b16 %v59
  %v295 = vunpack.c.l.b16 %v60
  %v296 = vunpack.c.l.b16 %v61
  %v297 = vunpack.c.l.b16 %v62
  %v298 = vunpack.c.l.b16 %v63
  %v299 = vunpack.c.l.b16 %v64
  %v300 = vunpack.c.l.b16 %v65
  %v301 = vunpack.c.l.b16 %v66
  %v302 = vunpack.c.l.b16 %v67
  %v303 = vunpack.c.l.b16 %v68
  %v304 = vunpack.c.l.b16 %v69
  %v305 = vunpack.c.l.b16 %v70
  %v306 = vunpack.c.l.b16 %v71
  %v307 = vunpack.c.l.b16 %v72
  %v308 = vunpack.c.l.b16 %v73
  %v309 = vunpack.c.l.b16 %v74
  %v310 = vunpack.c.l.b16 %v75
  %v311 = vunpack.c.l.b16 %v76
  %v312 = vunpack.c.l.b16 %v77
  %v313 = vunpack.c.l.b16 %v78
  %v314 = vunpack.c.l.b16 %v79
  %v315 = vunpack.c.l.b16 %v80
  %v316 = vunpack.c.l.b16 %v81
  %v317 = vunpack.c.l.b16 %v82
  %v318 = vunpack.c.l.b16 %v83
  %v319 = vunpack.c.l.b16 %v84
  %v320 = vunpack.c.l.b16 %v85
  %v321 = vunpack.c.l.b16 %v86
  %v322 = vunpack.c.l.b16 %v87
  %v323 = vunpack.c.l.b16 %v88
  %v324 = vunpack.c.l.b16 %v89
  %v325 = vunpack.c.l.b16 %v90
  %v326 = vunpack.c.l.b16 %v91
  %v327 = vunpack.c.l.b16 %v92
  %v328 = vunpack.c.l.b16 %v93
  %v329 = vunpack.c.l.b16 %v94
  %v330 = vunpack.c.l.b16 %v95
  %v331 = vunpack.c.l.b16 %v96
  %v332 = vunpack.c.l.b16 %v97
  %v333 = vunpack.c.l.b16 %v98
  %v334 = vunpack.c.l.b16 %v99
  %v335 = vunpack.c.l.b16 %v100
  %v336 = vunpack.c.l.b16 %v101
  %v337 = vunpack.c.l.b16 %v102
  %v338 = vunpack.c.l.b16 %v103
  %v339 = vunpack.c.l.b16 %v104
  %v340 = vunpack.c.l.b16 %v105
  %v341 = vunpack.c.l.b16 %v106
  %v342 = vunpack.c.l.b16 %v107
  %v343 = vunpack.c.l.b16 %v108
  %v344 = vunpack.c.l.b16 %v109
  %v345 = vunpack.c.l.b16 %v110
  %v346 = vunpack.c.l.b16 %v111
  %v347 = vunpack.c.l.b16 %v112
  %v348 = vunpack.c.l.b16 %v113
  %v349 = vunpack.c.l.b16 %v114
  %v350 = vunpack.c.l.b16 %v115
  %v351 = vunpack.c.l.b16 %v116
  %v352 = vunpack.c.l.b16 %v117
  %v353 = vunpack.c.l.b16 %v118
  %v354 = vunpack.c.l.b16 %v119
  %v355 = vunpack.c.l.b16 %v120
  %v356 = vunpack.c.l.b16 %v121
  %v357 = vunpack.c.l.b16 %v122
  %v358 = vunpack.c.l.b16 %v123
  %v359 = vunpack.c.l.b16 %v124
  %v360 = vunpack.c.l.b16 %v125
  %v361 = vunpack.c.l.b16 %v126
  %v362 = vpack.c.b16 %v265, %v264
  %v363 = vpack.c.b16 %v267, %v266
  %v364 = vpack.c.b16 %v269, %v268
  %v365 = vpack.c.b16 %v271, %v270
  %v366 = vpack.c.b16 %v273, %v272
  %v367 = vpack.c.b16 %v275, %v274
  %v368 = vpack.c.b16 %v277, %v276
  %v369 = vpack.c.b16 %v279, %v278
  %v370 = vpack.c.b16 %v281, %v280
  %v371 = vpack.c.b16 %v283, %v282
  %v372 = vpack.c.b16 %v285, %v284
  %v373 = vpack.c.b16 %v287, %v286
  %v374 = vpack.c.b16 %v289, %v288
  %v375 = vpack.c.b16 %v291, %v290
  %v376 = vpack.c.b16 %v293, %v292
  %v377 = vpack.c.b16 %v295, %v294
  %v378 = vpack.c.b16 %v297, %v296
  %v379 = vpack.c.b16 %v299, %v298
  %v380 = vpack.c.b16 %v301, %v300
  %v381 = vpack.c.b16 %v303, %v302
  %v382 = vpack.c.b16 %v305, %v304
  %v383 = vpack.c.b16 %v307, %v306
  %v384 = vpack.c.b16 %v309, %v308
  %v385 = vpack.c.b16 %v311, %v310
  %v386 = vpack.c.b16 %v313, %v312
  %v387 = vpack.c.b16 %v315, %v314
  %v388 = vpack.c.b16 %v317, %v316
  %v389 = vpack.c.b16 %v319, %v318
  %v390 = vpack.c.b16 %v321, %v320
  %v391 = vpack.c.b16 %v323, %v322
  %v392 = vpack.c.b16 %v325, %v324
  %v393 = vpack.c.b16 %v327, %v326
  %v394 = vpack.c.b16 %v329, %v328
  %v395 = vpack.c.b16 %v331, %v330
  %v396 = vpack.c.b16 %v333, %v332
  %v397 = vpack.c.b16 %v335, %v334
  %v398 = vpack.c.b16 %v337, %v336
  %v399 = vpack.c.b16 %v339, %v338
  %v400 = vpack.c.b16 %v341, %v340
  %v401 = vpack.c.b16 %v343, %v342
  %v402 = vpack.c.b16 %v345, %v344
  %v403 = vpack.c.b16 %v347, %v346
  %v404 = vpack.c.b16 %v349, %v348
  %v405 = vpack.c.b16 %v351, %v350
  %v406 = vpack.c.b16 %v353, %v352
  %v407 = vpack.c.b16 %v355, %v354
  %v408 = vpack.c.b16 %v357, %v356
  %v409 = vpack.c.b16 %v359, %v358
  %v410 = vpack.c.b16 %v361, %v360
  %vm460 = vcmask 130048
  %v462 = vsel %vm460, %v159, 0
  %464 = vmatpush.bf16.msra.mxu0 %v369
  %465 = vmatpush.bf16.msra.mxu0 %v368
  %466 = vmatpush.bf16.msra.mxu0 %v367
  %467 = vmatpush.bf16.msra.mxu0 %v366
  %468 = vmatpush.bf16.msra.mxu0 %v365
  %469 = vmatpush.bf16.msra.mxu0 %v364
  %470 = vmatpush.bf16.msra.mxu0 %v363
  %471 = vmatpush.bf16.msra.mxu0 %v362
  %472 = vmatmul.bf16.gmra.mxu0 %v153
  %v473 = vpop.f32.mrf.mxu0
  %v474 = vadd.f32 %v129, %v473
  %v475 = vpop.f32.mrf.mxu0
  %v476 = vadd.f32 %v129, %v475
  %477 = vdwg.mxu0
  %478 = vmatpush.bf16.msra.mxu0 %v377
  %479 = vmatpush.bf16.msra.mxu0 %v376
  %480 = vmatpush.bf16.msra.mxu0 %v375
  %481 = vmatpush.bf16.msra.mxu0 %v374
  %482 = vmatpush.bf16.msra.mxu0 %v373
  %483 = vmatpush.bf16.msra.mxu0 %v372
  %484 = vmatpush.bf16.msra.mxu0 %v371
  %485 = vmatpush.bf16.msra.mxu0 %v370
  %486 = vmatmul.bf16.gmra.mxu0 %v154
  %v487 = vpop.f32.mrf.mxu0
  %v488 = vadd.f32 %v474, %v487
  %v489 = vpop.f32.mrf.mxu0
  %v490 = vadd.f32 %v476, %v489
  %491 = vdwg.mxu0
  %492 = vmatpush.bf16.msra.mxu0 %v385
  %493 = vmatpush.bf16.msra.mxu0 %v384
  %494 = vmatpush.bf16.msra.mxu0 %v383
  %495 = vmatpush.bf16.msra.mxu0 %v382
  %496 = vmatpush.bf16.msra.mxu0 %v381
  %497 = vmatpush.bf16.msra.mxu0 %v380
  %498 = vmatpush.bf16.msra.mxu0 %v379
  %499 = vmatpush.bf16.msra.mxu0 %v378
  %500 = vmatmul.bf16.gmra.mxu0 %v155
  %v501 = vpop.f32.mrf.mxu0
  %v502 = vadd.f32 %v488, %v501
  %v503 = vpop.f32.mrf.mxu0
  %v504 = vadd.f32 %v490, %v503
  %505 = vdwg.mxu0
  %506 = vmatpush.bf16.msra.mxu0 %v393
  %507 = vmatpush.bf16.msra.mxu0 %v392
  %508 = vmatpush.bf16.msra.mxu0 %v391
  %509 = vmatpush.bf16.msra.mxu0 %v390
  %510 = vmatpush.bf16.msra.mxu0 %v389
  %511 = vmatpush.bf16.msra.mxu0 %v388
  %512 = vmatpush.bf16.msra.mxu0 %v387
  %513 = vmatpush.bf16.msra.mxu0 %v386
  %514 = vmatmul.bf16.gmra.mxu0 %v156
  %v515 = vpop.f32.mrf.mxu0
  %v516 = vadd.f32 %v502, %v515
  %v517 = vpop.f32.mrf.mxu0
  %v518 = vadd.f32 %v504, %v517
  %519 = vdwg.mxu0
  %520 = vmatpush.bf16.msra.mxu0 %v401
  %521 = vmatpush.bf16.msra.mxu0 %v400
  %522 = vmatpush.bf16.msra.mxu0 %v399
  %523 = vmatpush.bf16.msra.mxu0 %v398
  %524 = vmatpush.bf16.msra.mxu0 %v397
  %525 = vmatpush.bf16.msra.mxu0 %v396
  %526 = vmatpush.bf16.msra.mxu0 %v395
  %527 = vmatpush.bf16.msra.mxu0 %v394
  %528 = vmatmul.bf16.gmra.mxu0 %v157
  %v529 = vpop.f32.mrf.mxu0
  %v530 = vadd.f32 %v516, %v529
  %v531 = vpop.f32.mrf.mxu0
  %v532 = vadd.f32 %v518, %v531
  %533 = vdwg.mxu0
  %534 = vmatpush.bf16.msra.mxu0 %v409
  %535 = vmatpush.bf16.msra.mxu0 %v408
  %536 = vmatpush.bf16.msra.mxu0 %v407
  %537 = vmatpush.bf16.msra.mxu0 %v406
  %538 = vmatpush.bf16.msra.mxu0 %v405
  %539 = vmatpush.bf16.msra.mxu0 %v404
  %540 = vmatpush.bf16.msra.mxu0 %v403
  %541 = vmatpush.bf16.msra.mxu0 %v402
  %542 = vmatmul.bf16.gmra.mxu0 %v158
  %v543 = vpop.f32.mrf.mxu0
  %v544 = vadd.f32 %v530, %v543
  %v545 = vpop.f32.mrf.mxu0
  %v546 = vadd.f32 %v532, %v545
  %547 = vdwg.mxu0
  %548 = vmatpush.bf16.msra.mxu0 0
  %549 = vmatpush.bf16.msra.mxu0 0
  %550 = vmatpush.bf16.msra.mxu0 0
  %551 = vmatpush.bf16.msra.mxu0 0
  %552 = vmatpush.bf16.msra.mxu0 0
  %553 = vmatpush.bf16.msra.mxu0 0
  %554 = vmatpush.bf16.msra.mxu0 0
  %555 = vmatpush.bf16.msra.mxu0 %v410
  %556 = vmatmul.bf16.gmra.mxu0 %v462
  %v557 = vpop.f32.mrf.mxu0
  %v558 = vadd.f32 %v544, %v557
  %v559 = vpop.f32.mrf.mxu0
  %v560 = vadd.f32 %v546, %v559
  %561 = vdwg.mxu0
  %v562 = vmax.f32 %v558, 0.0
  %v563 = vmax.f32 %v560, 0.0
  %v564 = vld [vmem:[%s3] sm:$0xff]
  %v565 = vld [vmem:[%s3 + $0x8] sm:$0xff]
  %v566 = vld [vmem:[%s3 + $0x10] sm:$0xff]
  %v567 = vld [vmem:[%s3 + $0x18] sm:$0xff]
  %v568 = vld [vmem:[%s4] sm:$0x1]
  %v570 = vperm.slane %v568, 0
  %vm572 = vcmask 261120
  %v574 = vsel %vm572, %v562, 0
  %v577 = vsel %vm572, %v563, 0
  %579 = vmatpush.msra.mxu0 0.0
  %580 = vmatpush.msra.mxu0 0.0
  %581 = vmatpush.msra.mxu0 0.0
  %582 = vmatpush.msra.mxu0 0.0
  %583 = vmatpush.msra.mxu0 0.0
  %584 = vmatpush.msra.mxu0 0.0
  %585 = vmatpush.msra.mxu0 0.0
  %586 = vmatpush.msra.mxu0 0.0
  %587 = vmatpush.msra.mxu0 0.0
  %588 = vmatpush.msra.mxu0 0.0
  %589 = vmatpush.msra.mxu0 0.0
  %590 = vmatpush.msra.mxu0 0.0
  %591 = vmatpush.msra.mxu0 %v567
  %592 = vmatpush.msra.mxu0 %v566
  %593 = vmatpush.msra.mxu0 %v565
  %594 = vmatpush.msra.mxu0 %v564
  %595 = vmatmul.f32.gmra.mxu0 %v574
  %v596 = vpop.f32.mrf.mxu0
  %v597 = vadd.f32 %v570, %v596
  %598 = vmatmul.f32.gmra.mxu0 %v577
  %v599 = vpop.f32.mrf.mxu0
  %v600 = vadd.f32 %v570, %v599
  %601 = vdwg.mxu0
  %vm602 = vcmask 80896
  %v603 = vsel %vm602, %v597, -inf
  %604 = vmax.xlane.f32.xlu0 %v603
  %v605 = vpop.xlane.xlu0 %604
  %v606 = vsel %vm602, %v600, -inf
  %607 = vmax.xlane.f32.xlu0 %v606
  %v608 = vpop.xlane.xlu0 %607
  %v609 = vsub.f32 %v597, %v605
  %v610 = vsub.f32 %v600, %v608
  %v611 = vmul.f32 %v609, 1.442695
  %v612 = vpow.pop %v611
  %v613 = vmul.f32 %v610, 1.442695
  %v614 = vpow.pop %v613
  %v615 = vsel %vm602, %v612, 0.0
  %616 = vadd.xlane.f32.xlu0 %v615
  %v617 = vpop.xlane.xlu0 %616
  %v618 = vsel %vm602, %v614, 0.0
  %619 = vadd.xlane.f32.xlu0 %v618
  %v620 = vpop.xlane.xlu0 %619
  %v621 = vlog2.pop %v617
  %v622 = vmul.f32 %v621, 0.6931472
  %v623 = vlog2.pop %v620
  %v624 = vmul.f32 %v623, 0.6931472
  %v625 = vsub.f32 %v609, %v622
  %v626 = vsub.f32 %v610, %v624
  %627 = vst.msk [vmem:[%s5] sm:$0xff] %vm602, %v625
  %628 = vst.msk [vmem:[%s5 + $0x8] sm:$0xff] %vm602, %v626
  // Predicated region
  $region22: #{model2_forward.1} parent=0 // pred_check
    _
  $region23: #{model2_forward.1} parent=0 // pred_check_branch
    %630 = sbr.rel (0) target = $region25
  $region24: #{model2_forward.1} parent=0 // pred_region
    _
  $region25: #{model2_forward.1} parent=0 // pred_fallthru
    _
  // Predicated region
  $region26: #{model2_forward.1} parent=0 // pred_check
    _
  $region27: #{model2_forward.1} parent=0 // pred_check_branch
    %632 = sbr.rel (0) target = $region29
  $region28: #{model2_forward.1} parent=0 // pred_region
    _
  $region29: #{model2_forward.1} parent=0 // pred_fallthru
    _

</llo_original>
